<compile_context>
chip_gen: v5e
topology: v5e:2x2
jax: 0.10.0
libtpu: 0.0.40
codegen_flags: <defaults>
</compile_context>

<pallas_src>
import jax
import jax.numpy as jnp
from jax.experimental import pallas as pl
from jax.experimental.pallas import tpu as pltpu


def _attention_kernel(x_ref, wf_ref, w2t_ref, b3_ref, out_ref, att_ref):
    Bt, L, D = x_ref.shape
    d_a, n_labels = w2t_ref.shape

    # Collapse the batch tile into the sublane dim: one MXU-friendly matmul.
    x2 = x_ref[...].reshape(Bt * L, D)                                    # [Bt*L, D]

    # Fused x-matmul against [W1^T || W3^T]:
    #   first d_a cols      -> pre-activation of H
    #   last n_labels cols  -> x @ W3^T (needed only for the final reduce)
    hx = jnp.dot(x2, wf_ref[...], preferred_element_type=jnp.float32)    # [Bt*L, d_a+n_labels]
    h = jnp.tanh(hx[:, :d_a])                                            # [Bt*L, d_a]
    xw3 = hx[:, d_a:].reshape(Bt, L, n_labels)                           # [Bt, L, n_labels]

    # S = H @ W2^T
    s = jnp.dot(h, w2t_ref[...], preferred_element_type=jnp.float32)     # [Bt*L, n_labels]
    s = s.reshape(Bt, L, n_labels)

    # softmax over the sequence axis (PyTorch: F.softmax(att_weights, 1))
    m = jnp.max(s, axis=1, keepdims=True)
    e = jnp.exp(s - m)
    inv = pl.reciprocal(jnp.sum(e, axis=1, keepdims=True), approx=True)  # EUP slot
    a = e * inv                                                          # [Bt, L, n_labels]

    # out[b, n] = sum_L a[b, l, n] * (x @ W3^T)[b, l, n] + b3[n]
    out = jnp.sum(a * xw3, axis=1) + b3_ref[...]                         # [Bt, n_labels]

    out_ref[...] = out.astype(out_ref.dtype)
    # Store attention in natural [L, n_labels] layout (no in-kernel transpose).
    att_ref[...] = a.astype(att_ref.dtype)


def attention_layer_forward(x, w1, w2, w3, b3, *, batch_tile=8):
    """x: [B, L, D]; w1: [d_a, D]; w2: [n_labels, d_a]; w3: [n_labels, D]; b3: [n_labels].

    Returns (out [B, n_labels], att [B, n_labels, L]) matching the PyTorch module.
    """
    B, L, D = x.shape
    d_a = w1.shape[0]
    n_labels = w2.shape[0]

    bt = min(B, batch_tile)

    # Glue: pre-transpose & fuse weights so the kernel does plain row-major matmuls.
    wf = jnp.concatenate([w1.T, w3.T], axis=1)   # [D, d_a + n_labels]
    w2t = w2.T                                   # [d_a, n_labels]
    b3_2d = b3.reshape(1, n_labels)              # 2D for TPU layout friendliness

    out_shapes = (
        jax.ShapeDtypeStruct((B, n_labels), x.dtype),      # weighted output
        jax.ShapeDtypeStruct((B, L, n_labels), x.dtype),   # attention (natural layout)
    )

    grid_spec = pltpu.PrefetchScalarGridSpec(
        num_scalar_prefetch=0,
        grid=(pl.cdiv(B, bt),),
        in_specs=[
            pl.BlockSpec((bt, L, D), lambda b: (b, 0, 0)),             # x
            pl.BlockSpec((D, d_a + n_labels), lambda b: (0, 0)),       # [W1^T || W3^T]
            pl.BlockSpec((d_a, n_labels), lambda b: (0, 0)),           # W2^T
            pl.BlockSpec((1, n_labels), lambda b: (0, 0)),             # b3
        ],
        out_specs=[
            pl.BlockSpec((bt, n_labels), lambda b: (b, 0)),            # out
            pl.BlockSpec((bt, L, n_labels), lambda b: (b, 0, 0)),      # att (natural)
        ],
    )

    out, att_nat = pl.pallas_call(
        _attention_kernel,
        out_shape=out_shapes,
        grid_spec=grid_spec,
        compiler_params=pltpu.CompilerParams(
            dimension_semantics=("parallel",)
        ),
    )(x, wf, w2t, b3_2d)

    # Present the module's [B, n_labels, L] view (cheap XLA transpose outside
    # the kernel, keeping the in-kernel store transpose-free).
    att = jnp.transpose(att_nat, (0, 2, 1))
    return out, att


def _reference_forward(x, w1, w2, w3, b3):
    h = jnp.tanh(jnp.einsum("bld,ad->bla", x, w1))
    s = jnp.einsum("bla,na->bln", h, w2)
    a = jax.nn.softmax(s, axis=1)                 # softmax over L
    at = jnp.transpose(a, (0, 2, 1))              # [B, n_labels, L]
    wo = jnp.einsum("bnl,bld->bnd", at, x)        # [B, n_labels, D]
    out = jnp.sum(w3[None] * wo, axis=2) + b3[None]
    return out, at


if __name__ == "__main__":
    # Small shapes consistent with the module's forward.
    B, L, D = 2, 8, 32          # batch, max_len, size
    d_a = 16                    # args.d_a
    n_labels = 8                # n_labels[0]

    key = jax.random.PRNGKey(0)
    kx, k1, k2, k3, kb = jax.random.split(key, 5)

    x = jax.random.normal(kx, (B, L, D), dtype=jnp.float32)
    # Deterministic "init" mirroring normal(mean=0, std=0.03) for weights.
    w1 = 0.03 * jax.random.normal(k1, (d_a, D), dtype=jnp.float32)          # first_linears[0]
    w2 = 0.03 * jax.random.normal(k2, (n_labels, d_a), dtype=jnp.float32)   # second_linears[0]
    w3 = 0.03 * jax.random.normal(k3, (n_labels, D), dtype=jnp.float32)     # third_linears[0].weight
    b3 = 0.01 * jax.random.normal(kb, (n_labels,), dtype=jnp.float32)       # third_linears[0].bias

    out, att = attention_layer_forward(x, w1, w2, w3, b3)
    out = jax.block_until_ready(out)
    att = jax.block_until_ready(att)

    ref_out, ref_att = _reference_forward(x, w1, w2, w3, b3)
    assert out.shape == (B, n_labels)
    assert att.shape == (B, n_labels, L)
    # Tolerance loosened slightly vs. exact f32 because the softmax denominator
    # uses the EUP approximate reciprocal.
    assert jnp.allclose(out, ref_out, atol=1e-3, rtol=1e-3), "out mismatch"
    assert jnp.allclose(att, ref_att, atol=1e-3, rtol=1e-3), "att mismatch"

    print("KERNEL_OK")
</pallas_src>

<mosaic_0001>
module attributes {stable_mosaic.version = 11 : i64} {
  func.func @_attention_kernel(%arg0: i32, %arg1: memref<2x8x32xf32, #tpu.memory_space<vmem>>, %arg2: memref<32x24xf32, #tpu.memory_space<vmem>>, %arg3: memref<16x8xf32, #tpu.memory_space<vmem>>, %arg4: memref<1x8xf32, #tpu.memory_space<vmem>>, %arg5: memref<2x8xf32, #tpu.memory_space<vmem>>, %arg6: memref<2x8x8xf32, #tpu.memory_space<vmem>>) attributes {dimension_semantics = [#tpu.dimension_semantics<parallel>], iteration_bounds = array<i64: 1>, scalar_prefetch = 0 : i64, scratch_operands = 0 : i64, tpu.core_type = #tpu.core_type<tc>, window_params = [{transform_indices = @transform_0, window_bounds = array<i64: 2, 8, 32>}, {pipeline_mode = #tpu.pipeline_mode<synchronous>, transform_indices = @transform_1, window_bounds = array<i64: 32, 24>}, {pipeline_mode = #tpu.pipeline_mode<synchronous>, transform_indices = @transform_2, window_bounds = array<i64: 16, 8>}, {pipeline_mode = #tpu.pipeline_mode<synchronous>, transform_indices = @transform_3, window_bounds = array<i64: 1, 8>}, {transform_indices = @transform_4, window_bounds = array<i64: 2, 8>}, {transform_indices = @transform_5, window_bounds = array<i64: 2, 8, 8>}]} {
    %c0 = arith.constant 0 : index
    %c0_0 = arith.constant 0 : index
    %c0_1 = arith.constant 0 : index
    %0 = vector.load %arg1[%c0, %c0_0, %c0_1] : memref<2x8x32xf32, #tpu.memory_space<vmem>>, vector<2x8x32xf32>
    %1 = vector.shape_cast %0 : vector<2x8x32xf32> to vector<16x32xf32>
    %c0_2 = arith.constant 0 : index
    %c0_3 = arith.constant 0 : index
    %2 = vector.load %arg2[%c0_2, %c0_3] : memref<32x24xf32, #tpu.memory_space<vmem>>, vector<32x24xf32>
    %cst = arith.constant dense<0.000000e+00> : vector<16x24xf32>
    %3 = tpu.matmul %1, %2, %cst {dimension_numbers = #tpu.dot_dimension_numbers<[1], [0], [0], [1], [0, 0, 1, 1], [], []>} : vector<16x32xf32>, vector<32x24xf32>, vector<16x24xf32> -> vector<16x24xf32>
    %4 = vector.extract_strided_slice %3 {offsets = [0, 0], sizes = [16, 16], strides = [1, 1]} : vector<16x24xf32> to vector<16x16xf32>
    %5 = math.tanh %4 : vector<16x16xf32>
    %6 = vector.extract_strided_slice %3 {offsets = [0, 16], sizes = [16, 8], strides = [1, 1]} : vector<16x24xf32> to vector<16x8xf32>
    %7 = vector.shape_cast %6 : vector<16x8xf32> to vector<2x8x8xf32>
    %c0_4 = arith.constant 0 : index
    %c0_5 = arith.constant 0 : index
    %8 = vector.load %arg3[%c0_4, %c0_5] : memref<16x8xf32, #tpu.memory_space<vmem>>, vector<16x8xf32>
    %cst_6 = arith.constant dense<0.000000e+00> : vector<16x8xf32>
    %9 = tpu.matmul %5, %8, %cst_6 {dimension_numbers = #tpu.dot_dimension_numbers<[1], [0], [0], [1], [0, 0, 1, 1], [], []>} : vector<16x16xf32>, vector<16x8xf32>, vector<16x8xf32> -> vector<16x8xf32>
    %10 = vector.shape_cast %9 : vector<16x8xf32> to vector<2x8x8xf32>
    %cst_7 = arith.constant dense<0xFF800000> : vector<2x8xf32>
    %11 = vector.multi_reduction <maximumf>, %10, %cst_7 [1] : vector<2x8x8xf32> to vector<2x8xf32>
    %12 = vector.shape_cast %11 : vector<2x8xf32> to vector<2x1x8xf32>
    %13 = vector.broadcast %12 : vector<2x1x8xf32> to vector<2x8x8xf32>
    %14 = arith.subf %10, %13 : vector<2x8x8xf32>
    %15 = math.exp %14 : vector<2x8x8xf32>
    %cst_8 = arith.constant dense<0.000000e+00> : vector<2x8xf32>
    %16 = vector.multi_reduction <add>, %15, %cst_8 [1] : vector<2x8x8xf32> to vector<2x8xf32>
    %17 = vector.shape_cast %16 : vector<2x8xf32> to vector<2x1x8xf32>
    %18 = tpu.reciprocal %17 {approx = true} : vector<2x1x8xf32> -> vector<2x1x8xf32>
    %19 = vector.broadcast %18 : vector<2x1x8xf32> to vector<2x8x8xf32>
    %20 = arith.mulf %15, %19 : vector<2x8x8xf32>
    %21 = arith.mulf %20, %7 : vector<2x8x8xf32>
    %cst_9 = arith.constant dense<0.000000e+00> : vector<2x8xf32>
    %22 = vector.multi_reduction <add>, %21, %cst_9 [1] : vector<2x8x8xf32> to vector<2x8xf32>
    %c0_10 = arith.constant 0 : index
    %c0_11 = arith.constant 0 : index
    %23 = vector.load %arg4[%c0_10, %c0_11] : memref<1x8xf32, #tpu.memory_space<vmem>>, vector<1x8xf32>
    %24 = vector.broadcast %23 : vector<1x8xf32> to vector<2x8xf32>
    %25 = arith.addf %22, %24 : vector<2x8xf32>
    %c0_12 = arith.constant 0 : index
    %c0_13 = arith.constant 0 : index
    %26 = vector.load %arg5[%c0_12, %c0_13] : memref<2x8xf32, #tpu.memory_space<vmem>>, vector<2x8xf32>
    tpu.vector_store %arg5[%c0_12, %c0_13], %25 {strides = array<i32>} : memref<2x8xf32, #tpu.memory_space<vmem>>, vector<2x8xf32>,
    %c0_14 = arith.constant 0 : index
    %c0_15 = arith.constant 0 : index
    %c0_16 = arith.constant 0 : index
    %27 = vector.load %arg6[%c0_14, %c0_15, %c0_16] : memref<2x8x8xf32, #tpu.memory_space<vmem>>, vector<2x8x8xf32>
    tpu.vector_store %arg6[%c0_14, %c0_15, %c0_16], %20 {strides = array<i32>} : memref<2x8x8xf32, #tpu.memory_space<vmem>>, vector<2x8x8xf32>,
    return
  }
  func.func @transform_0(%arg0: i32) -> (i32, i32, i32) {
    %c0_i32 = arith.constant 0 : i32
    %c0_i32_0 = arith.constant 0 : i32
    %c0_i32_1 = arith.constant 0 : i32
    return %arg0, %c0_i32, %c0_i32_0 : i32, i32, i32
  }
  func.func @transform_1(%arg0: i32) -> (i32, i32) {
    %c0_i32 = arith.constant 0 : i32
    %c0_i32_0 = arith.constant 0 : i32
    %c0_i32_1 = arith.constant 0 : i32
    return %c0_i32, %c0_i32_0 : i32, i32
  }
  func.func @transform_2(%arg0: i32) -> (i32, i32) {
    %c0_i32 = arith.constant 0 : i32
    %c0_i32_0 = arith.constant 0 : i32
    %c0_i32_1 = arith.constant 0 : i32
    return %c0_i32, %c0_i32_0 : i32, i32
  }
  func.func @transform_3(%arg0: i32) -> (i32, i32) {
    %c0_i32 = arith.constant 0 : i32
    %c0_i32_0 = arith.constant 0 : i32
    %c0_i32_1 = arith.constant 0 : i32
    return %c0_i32, %c0_i32_0 : i32, i32
  }
  func.func @transform_4(%arg0: i32) -> (i32, i32) {
    %c0_i32 = arith.constant 0 : i32
    %c0_i32_0 = arith.constant 0 : i32
    return %arg0, %c0_i32 : i32, i32
  }
  func.func @transform_5(%arg0: i32) -> (i32, i32, i32) {
    %c0_i32 = arith.constant 0 : i32
    %c0_i32_0 = arith.constant 0 : i32
    %c0_i32_1 = arith.constant 0 : i32
    return %arg0, %c0_i32, %c0_i32_0 : i32, i32, i32
  }
}

</mosaic_0001>

<llo_original>
// kernel: tpu_custom_call.1
$region0: #{tpu_custom_call.1}
  #allocation0 [shape = 'u32[]', space=smem, size = 0x4, offset = 0x4, fixed_abs, tag = 'smem constant byte address 0x4 - core index']
  #allocation1 [shape = 'u32[72,128]{1,0:T(1,128)}', space=vmem, size = 0x9000, scoped, tag = 'internal scratch']
  %s0 = inlined_call_operand.vmem [shape: f32[2,8,32], index: 0, kind: input, shape index: {}]
  %s1 = inlined_call_operand.vmem [shape: f32[32,24], index: 1, kind: input, shape index: {}]
  %s2 = inlined_call_operand.vmem [shape: f32[16,8], index: 2, kind: input, shape index: {}]
  %s3 = inlined_call_operand.vmem [shape: f32[1,8], index: 3, kind: input, shape index: {}]
  %s4 = inlined_call_operand.hbm [shape: f32[2,8], index: 4, kind: output, shape index: {0}]
  %s5 = inlined_call_operand.hbm [shape: f32[2,8,8], index: 5, kind: output, shape index: {1}]
  %6 = xla_tuple %s4, %s5
  %s7 = sld [smem:[#allocation0]]
  $region34: #{tpu_custom_call.1} parent=0
    _
  %s9 = ssub.s32 1, %s7
  %s10 = scalar_select 0, %s9, %s7
  $region1: #{tpu_custom_call.1} parent=0
    #allocation2 [shape = 'u8[1024]{0}', space=vmem, size = 0x400, scoped, tag = 'output window, operand 0, single buffered']
    #allocation3 [shape = 's32[1]{0}', space=sflag, size = 0x4, scoped, tag = 'scoped memory for tpu_custom_call.1']
    #allocation4 [shape = 'u8[8192]{0}', space=vmem, size = 0x2000, scoped, tag = 'output window, operand 1, single buffered']
    #allocation5 [shape = 's32[1]{0}', space=sflag, size = 0x4, scoped, tag = 'scoped memory for tpu_custom_call.1']
    %11 = vsyncpa [#allocation3], 0
    %12 = vsyncpa [#allocation5], 0
    // Predicated region
    $region2: #{tpu_custom_call.1} parent=1 // pred_check
      _
    $region3: #{tpu_custom_call.1} parent=1 // pred_check_branch
      %14 = sbr.rel (0) target = $region5
    $region4: #{tpu_custom_call.1} parent=1 // pred_region
      _
    $region5: #{tpu_custom_call.1} parent=1 // pred_fallthru
      _
    // Predicated region
    $region6: #{tpu_custom_call.1} parent=1 // pred_check
      _
    $region7: #{tpu_custom_call.1} parent=1 // pred_check_branch
      %16 = sbr.rel (0) target = $region9
    $region8: #{tpu_custom_call.1} parent=1 // pred_region
      _
    $region9: #{tpu_custom_call.1} parent=1 // pred_fallthru
      _
    // Predicated region
    $region10: #{tpu_custom_call.1} parent=1 // pred_check
      _
    $region11: #{tpu_custom_call.1} parent=1 // pred_check_branch
      %18 = sbr.rel (0) target = $region13
    $region12: #{tpu_custom_call.1} parent=1 // pred_region
      _
    $region13: #{tpu_custom_call.1} parent=1 // pred_fallthru
      _
    // Predicated region
    $region14: #{tpu_custom_call.1} parent=1 // pred_check
      _
    $region15: #{tpu_custom_call.1} parent=1 // pred_check_branch
      %20 = sbr.rel (0) target = $region17
    $region16: #{tpu_custom_call.1} parent=1 // pred_region
      _
    $region17: #{tpu_custom_call.1} parent=1 // pred_fallthru
      _
    %v21 = vld [vmem:[%s0] sm:$0xff]
    %v22 = vld [vmem:[%s0 + $0x8] sm:$0xff]
    %v23 = vld [vmem:[%s1] sm:$0xff]
    %v24 = vld [vmem:[%s1 + $0x8] sm:$0xff]
    %v25 = vld [vmem:[%s1 + $0x10] sm:$0xff]
    %v26 = vld [vmem:[%s1 + $0x18] sm:$0xff]
    %vm27 = vcmask 261120
    %v29 = vsel %vm27, %v21, 0
    %v32 = vsel %vm27, %v22, 0
    %34 = vmatpush.msra.mxu0 0.0
    %35 = vmatpush.msra.mxu0 0.0
    %36 = vmatpush.msra.mxu0 0.0
    %37 = vmatpush.msra.mxu0 0.0
    %38 = vmatpush.msra.mxu0 0.0
    %39 = vmatpush.msra.mxu0 0.0
    %40 = vmatpush.msra.mxu0 0.0
    %41 = vmatpush.msra.mxu0 0.0
    %42 = vmatpush.msra.mxu0 0.0
    %43 = vmatpush.msra.mxu0 0.0
    %44 = vmatpush.msra.mxu0 0.0
    %45 = vmatpush.msra.mxu0 0.0
    %46 = vmatpush.msra.mxu0 %v26
    %47 = vmatpush.msra.mxu0 %v25
    %48 = vmatpush.msra.mxu0 %v24
    %49 = vmatpush.msra.mxu0 %v23
    %50 = vmatmul.f32.gmra.mxu0 %v29
    %v51 = vpop.f32.mrf.mxu0
    %v52 = vadd.f32 0.0, %v51
    %53 = vmatmul.f32.gmra.mxu0 %v32
    %v54 = vpop.f32.mrf.mxu0
    %v55 = vadd.f32 0.0, %v54
    %56 = vdwg.mxu0
    %v57 = vtanh.pop %v52
    %v58 = vtanh.pop %v55
    %v59 = vld [vmem:[%s2] sm:$0xff]
    %v60 = vld [vmem:[%s2 + $0x8] sm:$0xff]
    %vm61 = vcmask 130048
    %v63 = vsel %vm61, %v57, 0
    %v66 = vsel %vm61, %v58, 0
    %68 = vmatpush.msra.mxu0 0.0
    %69 = vmatpush.msra.mxu0 0.0
    %70 = vmatpush.msra.mxu0 0.0
    %71 = vmatpush.msra.mxu0 0.0
    %72 = vmatpush.msra.mxu0 0.0
    %73 = vmatpush.msra.mxu0 0.0
    %74 = vmatpush.msra.mxu0 0.0
    %75 = vmatpush.msra.mxu0 0.0
    %76 = vmatpush.msra.mxu0 0.0
    %77 = vmatpush.msra.mxu0 0.0
    %78 = vmatpush.msra.mxu0 0.0
    %79 = vmatpush.msra.mxu0 0.0
    %80 = vmatpush.msra.mxu0 0.0
    %81 = vmatpush.msra.mxu0 0.0
    %82 = vmatpush.msra.mxu0 %v60
    %83 = vmatpush.msra.mxu0 %v59
    %84 = vmatmul.f32.gmra.mxu0 %v63
    %v85 = vpop.f32.mrf.mxu0
    %v86 = vadd.f32 0.0, %v85
    %87 = vmatmul.f32.gmra.mxu0 %v66
    %v88 = vpop.f32.mrf.mxu0
    %v89 = vadd.f32 0.0, %v88
    %90 = vdwg.mxu0
    %vm91 = vcmask 64512
    %v92 = vsel %vm91, %v86, -inf
    %v93 = vrot.slane %v92, 4
    %v94 = vmax.f32 %v92, %v93
    %v95 = vrot.slane %v94, 2
    %v96 = vmax.f32 %v94, %v95
    %v97 = vrot.slane %v96, 1
    %v98 = vmax.f32 %v96, %v97
    %v99 = vsel %vm91, %v89, -inf
    %v100 = vrot.slane %v99, 4
    %v101 = vmax.f32 %v99, %v100
    %v102 = vrot.slane %v101, 2
    %v103 = vmax.f32 %v101, %v102
    %v104 = vrot.slane %v103, 1
    %v105 = vmax.f32 %v103, %v104
    %v106 = vsub.f32 %v86, %v98
    %v107 = vsub.f32 %v89, %v105
    %v108 = vmul.f32 %v106, 1.442695
    %v109 = vpow.pop %v108
    %v110 = vmul.f32 %v107, 1.442695
    %v111 = vpow.pop %v110
    %v112 = vsel %vm91, %v109, 0.0
    %v113 = vrot.slane %v112, 4
    %v114 = vadd.f32 %v112, %v113
    %v115 = vrot.slane %v114, 2
    %v116 = vadd.f32 %v114, %v115
    %v117 = vrot.slane %v116, 1
    %v118 = vadd.f32 %v116, %v117
    %v119 = vsel %vm91, %v111, 0.0
    %v120 = vrot.slane %v119, 4
    %v121 = vadd.f32 %v119, %v120
    %v122 = vrot.slane %v121, 2
    %v123 = vadd.f32 %v121, %v122
    %v124 = vrot.slane %v123, 1
    %v125 = vadd.f32 %v123, %v124
    %v126 = vrcp.pop %v118
    %v127 = vrcp.pop %v125
    %v128 = vmul.f32 %v109, %v126
    %v129 = vmul.f32 %v111, %v127
    %132 = vrot.lane.b32.xlu0 %v52, 112
    %v133 = vpop.permute.xlu0 %132
    %134 = vrot.lane.b32.xlu0 %v55, 112
    %v135 = vpop.permute.xlu0 %134
    %v138 = vmul.f32 %v128, %v133
    %v139 = vmul.f32 %v129, %v135
    %v140 = vsel %vm91, %v138, 0.0
    %v141 = vrot.slane %v140, 4
    %v142 = vadd.f32 %v140, %v141
    %v143 = vrot.slane %v142, 2
    %v144 = vadd.f32 %v142, %v143
    %v145 = vrot.slane %v144, 1
    %v146 = vadd.f32 %v144, %v145
    %v147 = vsel %vm91, %v139, 0.0
    %v148 = vrot.slane %v147, 4
    %v149 = vadd.f32 %v147, %v148
    %v150 = vrot.slane %v149, 2
    %v151 = vadd.f32 %v149, %v150
    %v152 = vrot.slane %v151, 1
    %v153 = vadd.f32 %v151, %v152
    %v154 = vld [vmem:[%s3] sm:$0x1]
    %v156 = vperm.slane %v154, 0
    %v158 = vadd.f32 %v146, %v156
    %v159 = vadd.f32 %v153, %v156
    %v162 = vrot.slane %v159, 7
    %vm163 = vcmask 1041409
    %v164 = vsel %vm163, %v162, %v158
    %vm166 = vcmask 58368
    %167 = vst.msk [vmem:[#allocation2] sm:$0x3] %vm166, %v164
    %168 = vst.msk [vmem:[#allocation4] sm:$0xff] %vm91, %v128
    %169 = vst.msk [vmem:[#allocation4 + $0x8] sm:$0xff] %vm91, %v129
    // Predicated region
    $region18: #{tpu_custom_call.1} parent=1 // pred_check
      _
    $region19: #{tpu_custom_call.1} parent=1 // pred_check_branch
      %171 = sbr.rel (0) target = $region21
    $region20: #{tpu_custom_call.1} parent=1 // pred_region
      %173 = vsyncadd [#allocation3], 0
      %s175 = sshll.u32 [#allocation2], 4
      %s176 = int_to_ptr.vmem [resolvable:$true] %s175
      %s177 = sshll.u32 %s4, 4
      %s178 = int_to_ptr.hbm [resolvable:$true] %s177
      %180 = dma.vmem_to_hbm [thread:$0]  %s176, 32, %s178, [#allocation3]
    $region21: #{tpu_custom_call.1} parent=1 // pred_fallthru
      _
    // Predicated region
    $region22: #{tpu_custom_call.1} parent=1 // pred_check
      _
    $region23: #{tpu_custom_call.1} parent=1 // pred_check_branch
      %182 = sbr.rel (0) target = $region25
    $region24: #{tpu_custom_call.1} parent=1 // pred_region
      %184 = vsyncadd [#allocation5], 0
      %s185 = sshll.u32 [#allocation4], 4
      %s186 = int_to_ptr.vmem [resolvable:$true] %s185
      %s187 = sshll.u32 %s5, 4
      %s188 = int_to_ptr.hbm [resolvable:$true] %s187
      %193 = dma.vmem_to_hbm [thread:$0]  %s186, 256, %s188, [#allocation5], 128, 128, 8
    $region25: #{tpu_custom_call.1} parent=1 // pred_fallthru
      _
    // Predicated region
    $region26: #{tpu_custom_call.1} parent=1 // pred_check
      _
    $region27: #{tpu_custom_call.1} parent=1 // pred_check_branch
      %195 = sbr.rel (0) target = $region29
    $region28: #{tpu_custom_call.1} parent=1 // pred_region
      %197 = dma.done [#allocation3], 32
    $region29: #{tpu_custom_call.1} parent=1 // pred_fallthru
      _
    // Predicated region
    $region30: #{tpu_custom_call.1} parent=1 // pred_check
      _
    $region31: #{tpu_custom_call.1} parent=1 // pred_check_branch
      %199 = sbr.rel (0) target = $region33
    $region32: #{tpu_custom_call.1} parent=1 // pred_region
      %201 = dma.done [#allocation5], 256
    $region33: #{tpu_custom_call.1} parent=1 // pred_fallthru
      _
    %202 = vsyncpa [#allocation3], 1
    %203 = vsyncpa [#allocation5], 1

</llo_original>
